<compile_context>
chip_gen: v7x
topology: tpu7x:2x2x1
jax: 0.10.0
libtpu: 0.0.40
codegen_flags: <defaults>
</compile_context>

<pallas_src>
import math

import jax
import jax.numpy as jnp
from jax.experimental import pallas as pl
from jax.experimental.pallas import tpu as pltpu

EPS = 1e-5
_VMEM_LIMIT = 32 * 1024 * 1024    # scoped-VMEM limit (safe on v5e/v6e/v7x)
_VMEM_BUDGET = 24 * 1024 * 1024   # keep a kernel's working set under this
_GEMM_TN = 256                    # N tile when Cout > 256 (multiple of 128)
_ELEM_TM = 1024                   # elementwise row tile


# ------------------------------- small helpers ------------------------------

def _round_up(x, m):
    return (x + m - 1) // m * m


def _fit_tile(dim, tmax):
    """Pick a tile <= tmax. Returns (tile, padded_dim). Full-extent if it fits."""
    if dim <= tmax:
        return dim, dim
    return tmax, _round_up(dim, tmax)


def _pad2d(x, rows, cols):
    r, c = x.shape
    if rows == r and cols == c:
        return x
    return jnp.pad(x, ((0, rows - r), (0, cols - c)))


def _n_tiling(cout):
    """Single full-extent N tile for Cout<=256, else 256-wide tiles (128-mult)."""
    if cout <= _GEMM_TN:
        return cout, cout
    return _GEMM_TN, _round_up(cout, _GEMM_TN)


def _pick_tm(kdim, tn, itemsize):
    """Largest M tile whose double-buffered footprint stays under budget."""
    for tm in (1024, 512, 256, 128):
        need = (2 * tm * kdim * itemsize      # A blocks (double-buffered)
                + 2 * kdim * tn * itemsize    # W blocks
                + 2 * tm * tn * itemsize      # O blocks
                + tm * tn * 4)                # f32 intermediate
        if need <= _VMEM_BUDGET:
            return tm
    return 64


# ----------------------------- Pallas kernels -------------------------------

def _make_conv3x3_s1_kernel(ho, wo, cin):
    """Fused-tap 3x3 / stride-1 / pad-1 conv for one batch element.

    x_ref : (Hp, Wp, Cin)  padded image resident in VMEM
    w_ref : (9, Cin, tn)   tap-major weight slab (t = 3*di + dj)
    o_ref : (Ho*Wo, tn)    conv output (compute dtype)
    sum/sq: (1, tn)        per-(batch, n-tile) partial batch statistics
    acc   : (Ho*Wo, tn)    f32 scratch accumulator
    """
    m = ho * wo

    def kernel(x_ref, w_ref, o_ref, sum_ref, sq_ref, acc_ref):
        for t in range(9):
            di, dj = divmod(t, 3)
            a = x_ref[di:di + ho, dj:dj + wo, :].reshape(m, cin)
            p = jnp.dot(a, w_ref[t], preferred_element_type=jnp.float32)
            if t == 0:
                acc_ref[...] = p
            else:
                acc_ref[...] += p
        y = acc_ref[...]
        o_ref[...] = y.astype(o_ref.dtype)
        sum_ref[...] = jnp.sum(y, axis=0, keepdims=True)
        sq_ref[...] = jnp.sum(y * y, axis=0, keepdims=True)

    return kernel


def gemm_stats_kernel(a_ref, w_ref, o_ref, sum_ref, sq_ref):
    """Single-K-block GEMM with fused per-channel sum / sum-of-squares.

    Padded (all-zero) A rows contribute exactly zero to the stats because there
    is no bias in this kernel -- do not add one without masking.
    """
    y = jnp.dot(a_ref[...], w_ref[...], preferred_element_type=jnp.float32)
    o_ref[...] = y.astype(o_ref.dtype)
    sum_ref[...] = jnp.sum(y, axis=0, keepdims=True)
    sq_ref[...] = jnp.sum(y * y, axis=0, keepdims=True)


def gemm_bias_kernel(a_ref, w_ref, b_ref, o_ref):
    """Single-K-block GEMM + bias (1x1 shortcut conv; no BN follows)."""
    y = jnp.dot(a_ref[...], w_ref[...], preferred_element_type=jnp.float32)
    o_ref[...] = (y + b_ref[...]).astype(o_ref.dtype)


def bn_relu_kernel(y_ref, scale_ref, shift_ref, o_ref):
    y = y_ref[...].astype(jnp.float32)
    o_ref[...] = jnp.maximum(y * scale_ref[...] + shift_ref[...],
                             0.0).astype(o_ref.dtype)


def bn_add_relu_kernel(y_ref, r_ref, scale_ref, shift_ref, o_ref):
    y = y_ref[...].astype(jnp.float32)
    r = r_ref[...].astype(jnp.float32)
    o_ref[...] = jnp.maximum(y * scale_ref[...] + shift_ref[...] + r,
                             0.0).astype(o_ref.dtype)


# ------------------------------ Pallas wrappers ------------------------------

def pallas_conv3x3_s1(x_pad, w9, cout, compute_dtype):
    """Fused-tap 3x3 stride-1 conv: y = conv(x), plus per-channel sum / sumsq.

    x_pad: (N, H+2, W+2, Cin), already zero-padded, compute dtype.
    w9:    (9, Cin, Cout) tap-major, compute dtype.
    Returns y (N*Ho*Wo, Cout) in compute dtype and f32 stats of shape (Cout,).
    """
    n, hp, wp, cin = x_pad.shape
    ho, wo = hp - 2, wp - 2
    m = ho * wo
    tn, n_p = _n_tiling(cout)
    w9p = w9 if n_p == cout else jnp.pad(w9, ((0, 0), (0, 0), (0, n_p - cout)))

    kernel = _make_conv3x3_s1_kernel(ho, wo, cin)
    out, s, q = pl.pallas_call(
        kernel,
        out_shape=(jax.ShapeDtypeStruct((n, m, n_p), compute_dtype),
                   jax.ShapeDtypeStruct((n, 1, n_p), jnp.float32),
                   jax.ShapeDtypeStruct((n, 1, n_p), jnp.float32)),
        grid=(n, n_p // tn),
        in_specs=[pl.BlockSpec((None, hp, wp, cin), lambda b, j: (b, 0, 0, 0)),
                  pl.BlockSpec((9, cin, tn), lambda b, j: (0, 0, j))],
        out_specs=(pl.BlockSpec((None, m, tn), lambda b, j: (b, 0, j)),
                   pl.BlockSpec((None, 1, tn), lambda b, j: (b, 0, j)),
                   pl.BlockSpec((None, 1, tn), lambda b, j: (b, 0, j))),
        scratch_shapes=[pltpu.VMEM((m, tn), jnp.float32)],
        compiler_params=pltpu.CompilerParams(
            # no output block is ever revisited -> both axes parallel (v7x).
            dimension_semantics=("parallel", "parallel"),
            vmem_limit_bytes=_VMEM_LIMIT),
    )(x_pad, w9p)

    y = out.reshape(n * m, n_p)
    s = jnp.sum(s, axis=(0, 1))
    q = jnp.sum(q, axis=(0, 1))
    if n_p != cout:
        y, s, q = y[:, :cout], s[:cout], q[:cout]
    return y, s, q


def pallas_gemm_stats(a, wmat, *, compute_dtype):
    """out = a @ w with fused per-channel sum / sum-of-squares (no bias).

    Single full-extent K block (K = 9*Cin fits VMEM for ResNet shapes); stats
    are per-m-tile partials so both grid axes stay parallel, reduced outside.
    """
    m, kdim = a.shape
    _, nout = wmat.shape
    itemsize = jnp.dtype(compute_dtype).itemsize
    tn, n_p = _n_tiling(nout)
    tm, m_p = _fit_tile(m, _pick_tm(kdim, tn, itemsize))

    a_p = _pad2d(a.astype(compute_dtype), m_p, kdim)
    w_p = _pad2d(wmat.astype(compute_dtype), kdim, n_p)
    grid = (m_p // tm, n_p // tn)   # A (large) indexed by m only -> read once

    out, s, q = pl.pallas_call(
        gemm_stats_kernel,
        out_shape=(jax.ShapeDtypeStruct((m_p, n_p), compute_dtype),
                   jax.ShapeDtypeStruct((grid[0], 1, n_p), jnp.float32),
                   jax.ShapeDtypeStruct((grid[0], 1, n_p), jnp.float32)),
        grid=grid,
        in_specs=[pl.BlockSpec((tm, kdim), lambda i, j: (i, 0)),
                  pl.BlockSpec((kdim, tn), lambda i, j: (0, j))],
        out_specs=(pl.BlockSpec((tm, tn), lambda i, j: (i, j)),
                   pl.BlockSpec((None, 1, tn), lambda i, j: (i, 0, j)),
                   pl.BlockSpec((None, 1, tn), lambda i, j: (i, 0, j))),
        compiler_params=pltpu.CompilerParams(
            dimension_semantics=("parallel", "parallel"),
            vmem_limit_bytes=_VMEM_LIMIT),
    )(a_p, w_p)

    s = jnp.sum(s, axis=(0, 1))
    q = jnp.sum(q, axis=(0, 1))
    if m_p != m or n_p != nout:
        out = out[:m, :nout]
        s, q = s[:nout], q[:nout]
    return out, s, q


def pallas_gemm_bias(a, wmat, bias, *, compute_dtype):
    """out = a @ w + bias (used for the 1x1 shortcut conv)."""
    m, kdim = a.shape
    _, nout = wmat.shape
    itemsize = jnp.dtype(compute_dtype).itemsize
    tn, n_p = _n_tiling(nout)
    tm, m_p = _fit_tile(m, _pick_tm(kdim, tn, itemsize))

    a_p = _pad2d(a.astype(compute_dtype), m_p, kdim)
    w_p = _pad2d(wmat.astype(compute_dtype), kdim, n_p)
    b_p = _pad2d(bias.reshape(1, nout).astype(jnp.float32), 1, n_p)

    out = pl.pallas_call(
        gemm_bias_kernel,
        out_shape=jax.ShapeDtypeStruct((m_p, n_p), compute_dtype),
        grid=(m_p // tm, n_p // tn),
        in_specs=[pl.BlockSpec((tm, kdim), lambda i, j: (i, 0)),
                  pl.BlockSpec((kdim, tn), lambda i, j: (0, j)),
                  pl.BlockSpec((1, tn), lambda i, j: (0, j))],
        out_specs=pl.BlockSpec((tm, tn), lambda i, j: (i, j)),
        compiler_params=pltpu.CompilerParams(
            dimension_semantics=("parallel", "parallel"),
            vmem_limit_bytes=_VMEM_LIMIT),
    )(a_p, w_p, b_p)
    if m_p != m or n_p != nout:
        out = out[:m, :nout]
    return out


def pallas_bn_act(y, scale, shift, res=None, *, out_dtype=jnp.float32,
                  tm=_ELEM_TM):
    """relu(y * scale + shift [+ res]); BN math in f32, output in out_dtype.

    For small channel counts the wrapper packs g rows into the lane axis so the
    kernel's last dimension is a multiple of 128 (dense, unmasked stores).
    """
    m, c = y.shape
    scale = scale.reshape(1, c).astype(jnp.float32)
    shift = shift.reshape(1, c).astype(jnp.float32)

    g = 1
    if c % 128 != 0:
        g_cand = 128 // math.gcd(c, 128)
        if m % g_cand == 0:
            g = g_cand
    if g > 1:
        y = y.reshape(m // g, g * c)
        scale = jnp.tile(scale, (1, g))
        shift = jnp.tile(shift, (1, g))
        if res is not None:
            res = res.reshape(m // g, g * c)

    rows, cols = y.shape
    tm_e, m_p = _fit_tile(rows, tm)
    y_p = _pad2d(y, m_p, cols)

    in_specs = [pl.BlockSpec((tm_e, cols), lambda i: (i, 0))]
    args = [y_p]
    if res is not None:
        in_specs.append(pl.BlockSpec((tm_e, cols), lambda i: (i, 0)))
        args.append(_pad2d(res, m_p, cols))
    in_specs += [pl.BlockSpec((1, cols), lambda i: (0, 0)),
                 pl.BlockSpec((1, cols), lambda i: (0, 0))]
    args += [scale, shift]

    kernel = bn_add_relu_kernel if res is not None else bn_relu_kernel
    out = pl.pallas_call(
        kernel,
        out_shape=jax.ShapeDtypeStruct((m_p, cols), out_dtype),
        grid=(m_p // tm_e,),
        in_specs=in_specs,
        out_specs=pl.BlockSpec((tm_e, cols), lambda i: (i, 0)),
        compiler_params=pltpu.CompilerParams(
            dimension_semantics=("parallel",),
            vmem_limit_bytes=_VMEM_LIMIT),
    )(*args)
    if m_p != rows:
        out = out[:rows]
    if g > 1:
        out = out.reshape(m, c)
    return out


# -------------------------------- glue (JAX) --------------------------------

def im2col(x_nhwc, kh, kw, stride, pad):
    """x: (N,H,W,C) -> ((N*Ho*Wo, kh*kw*C), (N, Ho, Wo)).  Strided fallback."""
    xpad = jnp.pad(x_nhwc, ((0, 0), (pad, pad), (pad, pad), (0, 0)))
    n, hp, wp, c = xpad.shape
    ho = (hp - kh) // stride + 1
    wo = (wp - kw) // stride + 1
    cols = []
    for i in range(kh):
        for j in range(kw):
            cols.append(xpad[:, i:i + ho * stride:stride,
                             j:j + wo * stride:stride, :])
    patches = jnp.stack(cols, axis=3)  # (N, Ho, Wo, kh*kw, C)
    return patches.reshape(n * ho * wo, kh * kw * c), (n, ho, wo)


def _oihw_to_mat(w):
    # (Cout, Cin, KH, KW) -> (KH*KW*Cin, Cout), matching im2col ordering.
    cout, cin, kh, kw = w.shape
    return jnp.transpose(w, (2, 3, 1, 0)).reshape(kh * kw * cin, cout)


def conv3x3(x_nhwc, w_oihw, *, stride, compute_dtype):
    """3x3 pad-1 conv + fused batch stats.  Returns (y, sum, sumsq, (n,ho,wo))."""
    n, h, w, cin = x_nhwc.shape
    cout = w_oihw.shape[0]
    ho = (h + 2 - 3) // stride + 1
    wo = (w + 2 - 3) // stride + 1
    tn, _ = _n_tiling(cout)
    itemsize = jnp.dtype(compute_dtype).itemsize
    fused_bytes = (2 * (h + 2) * (w + 2) * cin * itemsize   # image (dbl-buf)
                   + 2 * 9 * cin * tn * itemsize            # weights
                   + 2 * ho * wo * tn * itemsize            # output
                   + ho * wo * tn * 4)                      # f32 accumulator

    if stride == 1 and fused_bytes <= _VMEM_BUDGET:
        x_pad = jnp.pad(x_nhwc.astype(compute_dtype),
                        ((0, 0), (1, 1), (1, 1), (0, 0)))
        w9 = jnp.transpose(w_oihw, (2, 3, 1, 0)).reshape(9, cin, cout)
        y, s, q = pallas_conv3x3_s1(x_pad, w9.astype(compute_dtype), cout,
                                    compute_dtype)
    else:
        # TODO(synk): strided / very-large-image 3x3 convs still materialize an
        # XLA im2col patch matrix; fuse the strided tap gather in a follow-up.
        p, _ = im2col(x_nhwc.astype(compute_dtype), 3, 3, stride, 1)
        wmat = _oihw_to_mat(w_oihw).astype(compute_dtype)
        y, s, q = pallas_gemm_stats(p, wmat, compute_dtype=compute_dtype)
    return y, s, q, (n, ho, wo)


def _bn_scale_shift(s, q, count, gamma, beta):
    # Single-pass batch statistics (clamped at 0 to avoid NaN from
    # cancellation).  NOTE: exact only for training-mode (batch-stat) BN.
    mean = s / count
    var = jnp.maximum(q / count - mean * mean, 0.0)
    scale = gamma / jnp.sqrt(var + EPS)
    shift = beta - mean * scale
    return scale, shift


def residual_forward(x_nchw, params, *, strides, use_1x1conv,
                     compute_dtype=jnp.bfloat16):
    """Forward pass of the PyTorch `Residual` block (training-mode BatchNorm).

    conv1/conv2 biases are folded away: with batch-statistic BN a conv bias
    shifts the mean by exactly the same amount and cancels.  Only the 1x1
    shortcut conv (not followed by BN) keeps its bias.
    """
    x = jnp.transpose(x_nchw, (0, 2, 3, 1)).astype(jnp.float32)   # NCHW -> NHWC
    n, h, w, cin = x.shape
    cout = params["w1"].shape[0]

    # conv1 (3x3, pad 1, stride s) + fused batch stats
    y1, s1, q1, (_, ho, wo) = conv3x3(x, params["w1"], stride=strides,
                                      compute_dtype=compute_dtype)
    m1 = n * ho * wo
    scale1, shift1 = _bn_scale_shift(s1, q1, m1,
                                     params["gamma1"], params["beta1"])
    y1 = pallas_bn_act(y1, scale1, shift1, out_dtype=compute_dtype)  # bn1+relu

    # conv2 (3x3, pad 1, stride 1) + fused batch stats
    y1_img = y1.reshape(n, ho, wo, cout)
    y2, s2, q2, _ = conv3x3(y1_img, params["w2"], stride=1,
                            compute_dtype=compute_dtype)
    scale2, shift2 = _bn_scale_shift(s2, q2, m1,
                                     params["gamma2"], params["beta2"])

    # shortcut
    if use_1x1conv:
        # strided view of x feeds the 1x1 conv directly (no im2col / pad copy)
        xs = x[:, ::strides, ::strides, :].reshape(n * ho * wo, cin)
        w3 = params["w3"].reshape(cout, cin).T                    # (Cin, Cout)
        res = pallas_gemm_bias(xs, w3, params["b3"],
                               compute_dtype=compute_dtype)
    else:
        assert strides == 1 and cin == cout, \
            "identity shortcut requires strides == 1 and cin == cout"
        res = x.reshape(n * h * w, cin)

    out = pallas_bn_act(y2, scale2, shift2, res=res,
                        out_dtype=compute_dtype)                  # bn2+add+relu
    out = out.reshape(n, ho, wo, cout)
    return jnp.transpose(out, (0, 3, 1, 2)).astype(jnp.float32)   # back to NCHW


# ---------------------------- pure-JAX reference ----------------------------

def ref_forward(x, params, *, strides, use_1x1conv):
    def conv(x, w, b, stride, pad):
        y = jax.lax.conv_general_dilated(
            x, w, (stride, stride), ((pad, pad), (pad, pad)),
            dimension_numbers=("NCHW", "OIHW", "NCHW"))
        return y + b.reshape(1, -1, 1, 1)

    def bn(y, gamma, beta):
        mean = jnp.mean(y, axis=(0, 2, 3), keepdims=True)
        var = jnp.var(y, axis=(0, 2, 3), keepdims=True)
        return gamma.reshape(1, -1, 1, 1) * (y - mean) / jnp.sqrt(var + EPS) \
            + beta.reshape(1, -1, 1, 1)

    y = jax.nn.relu(bn(conv(x, params["w1"], params["b1"], strides, 1),
                       params["gamma1"], params["beta1"]))
    y = bn(conv(y, params["w2"], params["b2"], 1, 1),
           params["gamma2"], params["beta2"])
    sc = conv(x, params["w3"], params["b3"], strides, 0) if use_1x1conv else x
    return jax.nn.relu(y + sc)


# ----------------------------------- main -----------------------------------

if __name__ == "__main__":
    # Small shapes consistent with Residual(input_channels, num_channels,
    # use_1x1conv=True, strides=2) on an NCHW input.
    N, CIN, H, W = 2, 4, 16, 16
    COUT, STRIDES, USE_1X1 = 8, 2, True

    key = jax.random.PRNGKey(0)
    kx, k1, k2, k3, k4, k5, k6 = jax.random.split(key, 7)

    x = jax.random.uniform(kx, (N, CIN, H, W), dtype=jnp.float32)

    params = {
        "w1": jax.random.normal(k1, (COUT, CIN, 3, 3), jnp.float32) * 0.1,
        "b1": jax.random.normal(k2, (COUT,), jnp.float32) * 0.1,
        "w2": jax.random.normal(k3, (COUT, COUT, 3, 3), jnp.float32) * 0.1,
        "b2": jax.random.normal(k4, (COUT,), jnp.float32) * 0.1,
        "w3": jax.random.normal(k5, (COUT, CIN, 1, 1), jnp.float32) * 0.1,
        "b3": jax.random.normal(k6, (COUT,), jnp.float32) * 0.1,
        # BatchNorm defaults (PyTorch): gamma=1, beta=0
        "gamma1": jnp.ones((COUT,), jnp.float32),
        "beta1": jnp.zeros((COUT,), jnp.float32),
        "gamma2": jnp.ones((COUT,), jnp.float32),
        "beta2": jnp.zeros((COUT,), jnp.float32),
    }

    ref = ref_forward(x, params, strides=STRIDES, use_1x1conv=USE_1X1)

    # 1) strict check: f32 MXU operands must match the XLA reference tightly.
    out = residual_forward(x, params, strides=STRIDES, use_1x1conv=USE_1X1,
                           compute_dtype=jnp.float32)
    out = jax.block_until_ready(out)
    assert out.shape == (N, COUT, H // STRIDES, W // STRIDES), out.shape
    assert jnp.allclose(out, ref, rtol=1e-4, atol=1e-4), \
        float(jnp.max(jnp.abs(out - ref)))

    # 2) performance path (default): bf16 MXU operands, f32 accumulate.
    out_bf16 = residual_forward(x, params, strides=STRIDES,
                                use_1x1conv=USE_1X1,
                                compute_dtype=jnp.bfloat16)
    out_bf16 = jax.block_until_ready(out_bf16)
    assert jnp.allclose(out_bf16, ref, rtol=1e-1, atol=1e-1), \
        float(jnp.max(jnp.abs(out_bf16 - ref)))

    # 3) identity-shortcut branch (strides=1, cin==cout): exercises the fused
    #    stride-1 conv kernel for both conv1 and conv2.
    params_id = dict(params)
    params_id["w1"] = jax.random.normal(k1, (COUT, COUT, 3, 3), jnp.float32) * 0.1
    x_id = jax.random.uniform(kx, (N, COUT, H, W), dtype=jnp.float32)
    out_id = residual_forward(x_id, params_id, strides=1, use_1x1conv=False,
                              compute_dtype=jnp.float32)
    out_id = jax.block_until_ready(out_id)
    ref_id = ref_forward(x_id, params_id, strides=1, use_1x1conv=False)
    assert jnp.allclose(out_id, ref_id, rtol=1e-4, atol=1e-4), \
        float(jnp.max(jnp.abs(out_id - ref_id)))

    print("KERNEL_OK")
</pallas_src>

<mosaic_0001>
module attributes {stable_mosaic.version = 11 : i64} {
  func.func @gemm_stats_kernel(%arg0: i32, %arg1: i32, %arg2: memref<128x36xf32, #tpu.memory_space<vmem>>, %arg3: memref<36x8xf32, #tpu.memory_space<vmem>>, %arg4: memref<128x8xf32, #tpu.memory_space<vmem>>, %arg5: memref<1x1x8xf32, #tpu.memory_space<vmem>>, %arg6: memref<1x1x8xf32, #tpu.memory_space<vmem>>) attributes {dimension_semantics = [#tpu.dimension_semantics<parallel>, #tpu.dimension_semantics<parallel>], iteration_bounds = array<i64: 1, 1>, scalar_prefetch = 0 : i64, scratch_operands = 0 : i64, tpu.core_type = #tpu.core_type<tc>, window_params = [{transform_indices = @transform_0, window_bounds = array<i64: 128, 36>}, {transform_indices = @transform_1, window_bounds = array<i64: 36, 8>}, {transform_indices = @transform_2, window_bounds = array<i64: 128, 8>}, {transform_indices = @transform_3, window_bounds = array<i64: 1, 1, 8>}, {transform_indices = @transform_4, window_bounds = array<i64: 1, 1, 8>}]} {
    %c0 = arith.constant 0 : index
    %c0_0 = arith.constant 0 : index
    %0 = vector.load %arg2[%c0, %c0_0] : memref<128x36xf32, #tpu.memory_space<vmem>>, vector<128x36xf32>
    %c0_1 = arith.constant 0 : index
    %c0_2 = arith.constant 0 : index
    %1 = vector.load %arg3[%c0_1, %c0_2] : memref<36x8xf32, #tpu.memory_space<vmem>>, vector<36x8xf32>
    %cst = arith.constant dense<0.000000e+00> : vector<128x8xf32>
    %2 = tpu.matmul %0, %1, %cst {dimension_numbers = #tpu.dot_dimension_numbers<[1], [0], [0], [1], [0, 0, 1, 1], [], []>} : vector<128x36xf32>, vector<36x8xf32>, vector<128x8xf32> -> vector<128x8xf32>
    %c0_3 = arith.constant 0 : index
    %c0_4 = arith.constant 0 : index
    %3 = vector.load %arg4[%c0_3, %c0_4] : memref<128x8xf32, #tpu.memory_space<vmem>>, vector<128x8xf32>
    tpu.vector_store %arg4[%c0_3, %c0_4], %2 {strides = array<i32>} : memref<128x8xf32, #tpu.memory_space<vmem>>, vector<128x8xf32>,
    %cst_5 = arith.constant dense<0.000000e+00> : vector<8xf32>
    %4 = vector.multi_reduction <add>, %2, %cst_5 [0] : vector<128x8xf32> to vector<8xf32>
    %5 = vector.shape_cast %4 : vector<8xf32> to vector<1x8xf32>
    %c0_6 = arith.constant 0 : index
    %c0_7 = arith.constant 0 : index
    %c0_8 = arith.constant 0 : index
    %6 = vector.load %arg5[%c0_6, %c0_7, %c0_8] : memref<1x1x8xf32, #tpu.memory_space<vmem>>, vector<1x1x8xf32>
    %7 = vector.shape_cast %6 : vector<1x1x8xf32> to vector<1x8xf32>
    %8 = vector.shape_cast %5 : vector<1x8xf32> to vector<1x1x8xf32>
    tpu.vector_store %arg5[%c0_6, %c0_7, %c0_8], %8 {strides = array<i32>} : memref<1x1x8xf32, #tpu.memory_space<vmem>>, vector<1x1x8xf32>,
    %9 = arith.mulf %2, %2 : vector<128x8xf32>
    %cst_9 = arith.constant dense<0.000000e+00> : vector<8xf32>
    %10 = vector.multi_reduction <add>, %9, %cst_9 [0] : vector<128x8xf32> to vector<8xf32>
    %11 = vector.shape_cast %10 : vector<8xf32> to vector<1x8xf32>
    %c0_10 = arith.constant 0 : index
    %c0_11 = arith.constant 0 : index
    %c0_12 = arith.constant 0 : index
    %12 = vector.load %arg6[%c0_10, %c0_11, %c0_12] : memref<1x1x8xf32, #tpu.memory_space<vmem>>, vector<1x1x8xf32>
    %13 = vector.shape_cast %12 : vector<1x1x8xf32> to vector<1x8xf32>
    %14 = vector.shape_cast %11 : vector<1x8xf32> to vector<1x1x8xf32>
    tpu.vector_store %arg6[%c0_10, %c0_11, %c0_12], %14 {strides = array<i32>} : memref<1x1x8xf32, #tpu.memory_space<vmem>>, vector<1x1x8xf32>,
    return
  }
  func.func @transform_0(%arg0: i32, %arg1: i32) -> (i32, i32) {
    %c0_i32 = arith.constant 0 : i32
    %c0_i32_0 = arith.constant 0 : i32
    return %arg0, %c0_i32 : i32, i32
  }
  func.func @transform_1(%arg0: i32, %arg1: i32) -> (i32, i32) {
    %c0_i32 = arith.constant 0 : i32
    %c0_i32_0 = arith.constant 0 : i32
    return %c0_i32, %arg1 : i32, i32
  }
  func.func @transform_2(%arg0: i32, %arg1: i32) -> (i32, i32) {
    %c0_i32 = arith.constant 0 : i32
    return %arg0, %arg1 : i32, i32
  }
  func.func @transform_3(%arg0: i32, %arg1: i32) -> (i32, i32, i32) {
    %c0_i32 = arith.constant 0 : i32
    %c0_i32_0 = arith.constant 0 : i32
    return %arg0, %c0_i32, %arg1 : i32, i32, i32
  }
  func.func @transform_4(%arg0: i32, %arg1: i32) -> (i32, i32, i32) {
    %c0_i32 = arith.constant 0 : i32
    %c0_i32_0 = arith.constant 0 : i32
    return %arg0, %c0_i32, %arg1 : i32, i32, i32
  }
}

</mosaic_0001>

<llo_original>
// kernel: tpu_custom_call.1
$region0: #{tpu_custom_call.1}
  #allocation0 [shape = 'u32[]', space=smem, size = 0x4, offset = 0x4, fixed_abs, tag = 'smem constant byte address 0x4 - core index']
  #allocation1 [shape = 'u32[144,128]{1,0:T(1,128)}', space=vmem, size = 0x12000, scoped, tag = 'internal scratch']
  %s0 = inlined_call_operand.vmem [shape: f32[128,36], index: 0, kind: input, shape index: {}]
  %s1 = inlined_call_operand.vmem [shape: f32[36,8], index: 1, kind: input, shape index: {}]
  %s2 = inlined_call_operand.vmem [shape: f32[128,8], index: 2, kind: output, shape index: {0}]
  %s3 = inlined_call_operand.hbm [shape: f32[1,1,8], index: 3, kind: output, shape index: {1}]
  %s4 = inlined_call_operand.hbm [shape: f32[1,1,8], index: 4, kind: output, shape index: {2}]
  %5 = xla_tuple %s2, %s3, %s4
  %s6 = sld [smem:[#allocation0]]
  $region34: #{tpu_custom_call.1} parent=0
    _
  %s8 = ssub.s32 1, %s6
  %s9 = scalar_select 0, %s8, %s6
  $region1: #{tpu_custom_call.1} parent=0
    #allocation2 [shape = 'u8[512]{0}', space=vmem, size = 0x400, scoped, tag = 'output window, operand 1, single buffered']
    #allocation3 [shape = 's32[1]{0}', space=sflag, size = 0x4, scoped, tag = 'scoped memory for tpu_custom_call.1']
    #allocation4 [shape = 'u8[512]{0}', space=vmem, size = 0x400, scoped, tag = 'output window, operand 2, single buffered']
    #allocation5 [shape = 's32[1]{0}', space=sflag, size = 0x4, scoped, tag = 'scoped memory for tpu_custom_call.1']
    %10 = vsyncpa [#allocation3], 0
    %11 = vsyncpa [#allocation5], 0
    // Predicated region
    $region2: #{tpu_custom_call.1} parent=1 // pred_check
      _
    $region3: #{tpu_custom_call.1} parent=1 // pred_check_branch
      %13 = sbr.rel (0) target = $region5
    $region4: #{tpu_custom_call.1} parent=1 // pred_region
      _
    $region5: #{tpu_custom_call.1} parent=1 // pred_fallthru
      _
    // Predicated region
    $region6: #{tpu_custom_call.1} parent=1 // pred_check
      _
    $region7: #{tpu_custom_call.1} parent=1 // pred_check_branch
      %15 = sbr.rel (0) target = $region9
    $region8: #{tpu_custom_call.1} parent=1 // pred_region
      _
    $region9: #{tpu_custom_call.1} parent=1 // pred_fallthru
      _
    %v16 = vld [vmem:[%s0] sm:$0xff]
    %v17 = vld [vmem:[%s0 + $0x8] sm:$0xff]
    %v18 = vld [vmem:[%s0 + $0x10] sm:$0xff]
    %v19 = vld [vmem:[%s0 + $0x18] sm:$0xff]
    %v20 = vld [vmem:[%s0 + $0x20] sm:$0xff]
    %v21 = vld [vmem:[%s0 + $0x28] sm:$0xff]
    %v22 = vld [vmem:[%s0 + $0x30] sm:$0xff]
    %v23 = vld [vmem:[%s0 + $0x38] sm:$0xff]
    %v24 = vld [vmem:[%s0 + $0x40] sm:$0xff]
    %v25 = vld [vmem:[%s0 + $0x48] sm:$0xff]
    %v26 = vld [vmem:[%s0 + $0x50] sm:$0xff]
    %v27 = vld [vmem:[%s0 + $0x58] sm:$0xff]
    %v28 = vld [vmem:[%s0 + $0x60] sm:$0xff]
    %v29 = vld [vmem:[%s0 + $0x68] sm:$0xff]
    %v30 = vld [vmem:[%s0 + $0x70] sm:$0xff]
    %v31 = vld [vmem:[%s0 + $0x78] sm:$0xff]
    %v32 = vld [vmem:[%s1] sm:$0xff]
    %v33 = vld [vmem:[%s1 + $0x8] sm:$0xff]
    %v34 = vld [vmem:[%s1 + $0x10] sm:$0xff]
    %v35 = vld [vmem:[%s1 + $0x18] sm:$0xff]
    %v36 = vld [vmem:[%s1 + $0x20] sm:$0xf]
    %vm37 = vcmask 293888
    %v39 = vsel %vm37, %v16, 0
    %v42 = vsel %vm37, %v17, 0
    %v45 = vsel %vm37, %v18, 0
    %v48 = vsel %vm37, %v19, 0
    %v51 = vsel %vm37, %v20, 0
    %v54 = vsel %vm37, %v21, 0
    %v57 = vsel %vm37, %v22, 0
    %v60 = vsel %vm37, %v23, 0
    %v63 = vsel %vm37, %v24, 0
    %v66 = vsel %vm37, %v25, 0
    %v69 = vsel %vm37, %v26, 0
    %v72 = vsel %vm37, %v27, 0
    %v75 = vsel %vm37, %v28, 0
    %v78 = vsel %vm37, %v29, 0
    %v81 = vsel %vm37, %v30, 0
    %v84 = vsel %vm37, %v31, 0
    %vm86 = vcmask 1043456
    %v88 = vsel %vm86, %v36, 0
    %90 = vmatprep.subr.mxu0 0.0
    %91 = vmatpush1.msra.mxu0 %v32
    %92 = vmatprep.subr.mxu0 0.0
    %93 = vmatpush1.msra.mxu0 %v33
    %94 = vmatprep.subr.mxu0 0.0
    %95 = vmatpush1.msra.mxu0 %v34
    %96 = vmatprep.subr.mxu0 0.0
    %97 = vmatpush1.msra.mxu0 %v35
    %98 = vmatprep.subr.mxu0 0.0
    %99 = vmatpush1.msra.mxu0 %v88
    %100 = vmatprep.subr.mxu0 0.0
    %101 = vmatpush1.msra.mxu0 0.0
    %102 = vmatprep.subr.mxu0 0.0
    %103 = vmatpush1.msra.mxu0 0.0
    %104 = vmatprep.subr.mxu0 0.0
    %105 = vmatpush1.msra.mxu0 0.0
    %106 = vmatprep.subr.mxu0 0.0
    %107 = vmatpush1.msra.mxu0 0.0
    %108 = vmatprep.subr.mxu0 0.0
    %109 = vmatpush1.msra.mxu0 0.0
    %110 = vmatprep.subr.mxu0 0.0
    %111 = vmatpush1.msra.mxu0 0.0
    %112 = vmatprep.subr.mxu0 0.0
    %113 = vmatpush1.msra.mxu0 0.0
    %114 = vmatprep.subr.mxu0 0.0
    %115 = vmatpush1.msra.mxu0 0.0
    %116 = vmatprep.subr.mxu0 0.0
    %117 = vmatpush1.msra.mxu0 0.0
    %118 = vmatprep.subr.mxu0 0.0
    %119 = vmatpush1.msra.mxu0 0.0
    %120 = vmatprep.subr.mxu0 0.0
    %121 = vmatpush1.msra.mxu0 0.0
    %122 = vmatprep.subr.mxu0 0.0
    %123 = vmatpush1.msra.mxu0 0.0
    %124 = vmatprep.subr.mxu0 0.0
    %125 = vmatpush1.msra.mxu0 0.0
    %126 = vmatprep.subr.mxu0 0.0
    %127 = vmatpush1.msra.mxu0 0.0
    %128 = vmatprep.subr.mxu0 0.0
    %129 = vmatpush1.msra.mxu0 0.0
    %130 = vmatprep.subr.mxu0 0.0
    %131 = vmatpush1.msra.mxu0 0.0
    %132 = vmatprep.subr.mxu0 0.0
    %133 = vmatpush1.msra.mxu0 0.0
    %134 = vmatprep.subr.mxu0 0.0
    %135 = vmatpush1.msra.mxu0 0.0
    %136 = vmatprep.subr.mxu0 0.0
    %137 = vmatpush1.msra.mxu0 0.0
    %138 = vmatprep.subr.mxu0 0.0
    %139 = vmatpush1.msra.mxu0 0.0
    %140 = vmatprep.subr.mxu0 0.0
    %141 = vmatpush1.msra.mxu0 0.0
    %142 = vmatprep.subr.mxu0 0.0
    %143 = vmatpush1.msra.mxu0 0.0
    %144 = vmatprep.subr.mxu0 0.0
    %145 = vmatpush1.msra.mxu0 0.0
    %146 = vmatprep.subr.mxu0 0.0
    %147 = vmatpush1.msra.mxu0 0.0
    %148 = vmatprep.subr.mxu0 0.0
    %149 = vmatpush1.msra.mxu0 0.0
    %150 = vmatprep.subr.mxu0 0.0
    %151 = vmatpush1.msra.mxu0 0.0
    %152 = vmatprep.subr.mxu0 0.0
    %153 = vmatpush1.msra.mxu0 0.0
    %154 = vmatprep.mubr.f32.mxu0 0.0
    %155 = vmatmul.mubr.f32.gmra.mrb[0].mxu0 %v39
    %v156 = vpop.f32.mrb[0].mxu0
    %v157 = vadd.f32 0.0, %v156
    %v158 = vpop.f32.mrb[0].mxu0
    %159 = vmatprep.mubr.f32.mxu0 0.0
    %160 = vmatmul.mubr.f32.gmra.mrb[0].mxu0 %v42
    %v161 = vpop.f32.mrb[0].mxu0
    %v162 = vadd.f32 0.0, %v161
    %v163 = vpop.f32.mrb[0].mxu0
    %164 = vmatprep.mubr.f32.mxu0 0.0
    %165 = vmatmul.mubr.f32.gmra.mrb[0].mxu0 %v45
    %v166 = vpop.f32.mrb[0].mxu0
    %v167 = vadd.f32 0.0, %v166
    %v168 = vpop.f32.mrb[0].mxu0
    %169 = vmatprep.mubr.f32.mxu0 0.0
    %170 = vmatmul.mubr.f32.gmra.mrb[0].mxu0 %v48
    %v171 = vpop.f32.mrb[0].mxu0
    %v172 = vadd.f32 0.0, %v171
    %v173 = vpop.f32.mrb[0].mxu0
    %174 = vmatprep.mubr.f32.mxu0 0.0
    %175 = vmatmul.mubr.f32.gmra.mrb[0].mxu0 %v51
    %v176 = vpop.f32.mrb[0].mxu0
    %v177 = vadd.f32 0.0, %v176
    %v178 = vpop.f32.mrb[0].mxu0
    %179 = vmatprep.mubr.f32.mxu0 0.0
    %180 = vmatmul.mubr.f32.gmra.mrb[0].mxu0 %v54
    %v181 = vpop.f32.mrb[0].mxu0
    %v182 = vadd.f32 0.0, %v181
    %v183 = vpop.f32.mrb[0].mxu0
    %184 = vmatprep.mubr.f32.mxu0 0.0
    %185 = vmatmul.mubr.f32.gmra.mrb[0].mxu0 %v57
    %v186 = vpop.f32.mrb[0].mxu0
    %v187 = vadd.f32 0.0, %v186
    %v188 = vpop.f32.mrb[0].mxu0
    %189 = vmatprep.mubr.f32.mxu0 0.0
    %190 = vmatmul.mubr.f32.gmra.mrb[0].mxu0 %v60
    %v191 = vpop.f32.mrb[0].mxu0
    %v192 = vadd.f32 0.0, %v191
    %v193 = vpop.f32.mrb[0].mxu0
    %194 = vmatprep.mubr.f32.mxu0 0.0
    %195 = vmatmul.mubr.f32.gmra.mrb[0].mxu0 %v63
    %v196 = vpop.f32.mrb[0].mxu0
    %v197 = vadd.f32 0.0, %v196
    %v198 = vpop.f32.mrb[0].mxu0
    %199 = vmatprep.mubr.f32.mxu0 0.0
    %200 = vmatmul.mubr.f32.gmra.mrb[0].mxu0 %v66
    %v201 = vpop.f32.mrb[0].mxu0
    %v202 = vadd.f32 0.0, %v201
    %v203 = vpop.f32.mrb[0].mxu0
    %204 = vmatprep.mubr.f32.mxu0 0.0
    %205 = vmatmul.mubr.f32.gmra.mrb[0].mxu0 %v69
    %v206 = vpop.f32.mrb[0].mxu0
    %v207 = vadd.f32 0.0, %v206
    %v208 = vpop.f32.mrb[0].mxu0
    %209 = vmatprep.mubr.f32.mxu0 0.0
    %210 = vmatmul.mubr.f32.gmra.mrb[0].mxu0 %v72
    %v211 = vpop.f32.mrb[0].mxu0
    %v212 = vadd.f32 0.0, %v211
    %v213 = vpop.f32.mrb[0].mxu0
    %214 = vmatprep.mubr.f32.mxu0 0.0
    %215 = vmatmul.mubr.f32.gmra.mrb[0].mxu0 %v75
    %v216 = vpop.f32.mrb[0].mxu0
    %v217 = vadd.f32 0.0, %v216
    %v218 = vpop.f32.mrb[0].mxu0
    %219 = vmatprep.mubr.f32.mxu0 0.0
    %220 = vmatmul.mubr.f32.gmra.mrb[0].mxu0 %v78
    %v221 = vpop.f32.mrb[0].mxu0
    %v222 = vadd.f32 0.0, %v221
    %v223 = vpop.f32.mrb[0].mxu0
    %224 = vmatprep.mubr.f32.mxu0 0.0
    %225 = vmatmul.mubr.f32.gmra.mrb[0].mxu0 %v81
    %v226 = vpop.f32.mrb[0].mxu0
    %v227 = vadd.f32 0.0, %v226
    %v228 = vpop.f32.mrb[0].mxu0
    %229 = vmatprep.mubr.f32.mxu0 0.0
    %230 = vmatmul.mubr.f32.gmra.mrb[0].mxu0 %v84
    %v231 = vpop.f32.mrb[0].mxu0
    %v232 = vadd.f32 0.0, %v231
    %v233 = vpop.f32.mrb[0].mxu0
    %234 = vdwg.mxu0
    %vm235 = vcmask 64512
    %236 = vst.msk [vmem:[%s2] sm:$0xff] %vm235, %v157
    %237 = vst.msk [vmem:[%s2 + $0x8] sm:$0xff] %vm235, %v162
    %238 = vst.msk [vmem:[%s2 + $0x10] sm:$0xff] %vm235, %v167
    %239 = vst.msk [vmem:[%s2 + $0x18] sm:$0xff] %vm235, %v172
    %240 = vst.msk [vmem:[%s2 + $0x20] sm:$0xff] %vm235, %v177
    %241 = vst.msk [vmem:[%s2 + $0x28] sm:$0xff] %vm235, %v182
    %242 = vst.msk [vmem:[%s2 + $0x30] sm:$0xff] %vm235, %v187
    %243 = vst.msk [vmem:[%s2 + $0x38] sm:$0xff] %vm235, %v192
    %244 = vst.msk [vmem:[%s2 + $0x40] sm:$0xff] %vm235, %v197
    %245 = vst.msk [vmem:[%s2 + $0x48] sm:$0xff] %vm235, %v202
    %246 = vst.msk [vmem:[%s2 + $0x50] sm:$0xff] %vm235, %v207
    %247 = vst.msk [vmem:[%s2 + $0x58] sm:$0xff] %vm235, %v212
    %248 = vst.msk [vmem:[%s2 + $0x60] sm:$0xff] %vm235, %v217
    %249 = vst.msk [vmem:[%s2 + $0x68] sm:$0xff] %vm235, %v222
    %250 = vst.msk [vmem:[%s2 + $0x70] sm:$0xff] %vm235, %v227
    %251 = vst.msk [vmem:[%s2 + $0x78] sm:$0xff] %vm235, %v232
    %v252 = vsel %vm235, %v157, 0.0
    %v253 = vsel %vm235, %v162, 0.0
    %v254 = vadd.f32 %v252, %v253
    %v255 = vsel %vm235, %v167, 0.0
    %v256 = vadd.f32 %v254, %v255
    %v257 = vsel %vm235, %v172, 0.0
    %v258 = vadd.f32 %v256, %v257
    %v259 = vsel %vm235, %v177, 0.0
    %v260 = vadd.f32 %v258, %v259
    %v261 = vsel %vm235, %v182, 0.0
    %v262 = vadd.f32 %v260, %v261
    %v263 = vsel %vm235, %v187, 0.0
    %v264 = vadd.f32 %v262, %v263
    %v265 = vsel %vm235, %v192, 0.0
    %v266 = vadd.f32 %v264, %v265
    %v267 = vsel %vm235, %v197, 0.0
    %v268 = vadd.f32 %v266, %v267
    %v269 = vsel %vm235, %v202, 0.0
    %v270 = vadd.f32 %v268, %v269
    %v271 = vsel %vm235, %v207, 0.0
    %v272 = vadd.f32 %v270, %v271
    %v273 = vsel %vm235, %v212, 0.0
    %v274 = vadd.f32 %v272, %v273
    %v275 = vsel %vm235, %v217, 0.0
    %v276 = vadd.f32 %v274, %v275
    %v277 = vsel %vm235, %v222, 0.0
    %v278 = vadd.f32 %v276, %v277
    %v279 = vsel %vm235, %v227, 0.0
    %v280 = vadd.f32 %v278, %v279
    %v281 = vsel %vm235, %v232, 0.0
    %v282 = vadd.f32 %v280, %v281
    %v283 = vrot.slane %v282, 4
    %v284 = vadd.f32 %v282, %v283
    %v285 = vrot.slane %v284, 2
    %v286 = vadd.f32 %v284, %v285
    %v287 = vrot.slane %v286, 1
    %v288 = vadd.f32 %v286, %v287
    %vm289 = vcmask 57344
    %290 = vst.msk [vmem:[#allocation2] sm:$0x1] %vm289, %v288
    %v291 = vmul.f32 %v157, %v157
    %v292 = vmul.f32 %v162, %v162
    %v293 = vmul.f32 %v167, %v167
    %v294 = vmul.f32 %v172, %v172
    %v295 = vmul.f32 %v177, %v177
    %v296 = vmul.f32 %v182, %v182
    %v297 = vmul.f32 %v187, %v187
    %v298 = vmul.f32 %v192, %v192
    %v299 = vmul.f32 %v197, %v197
    %v300 = vmul.f32 %v202, %v202
    %v301 = vmul.f32 %v207, %v207
    %v302 = vmul.f32 %v212, %v212
    %v303 = vmul.f32 %v217, %v217
    %v304 = vmul.f32 %v222, %v222
    %v305 = vmul.f32 %v227, %v227
    %v306 = vmul.f32 %v232, %v232
    %v307 = vsel %vm235, %v291, 0.0
    %v308 = vsel %vm235, %v292, 0.0
    %v309 = vadd.f32 %v307, %v308
    %v310 = vsel %vm235, %v293, 0.0
    %v311 = vadd.f32 %v309, %v310
    %v312 = vsel %vm235, %v294, 0.0
    %v313 = vadd.f32 %v311, %v312
    %v314 = vsel %vm235, %v295, 0.0
    %v315 = vadd.f32 %v313, %v314
    %v316 = vsel %vm235, %v296, 0.0
    %v317 = vadd.f32 %v315, %v316
    %v318 = vsel %vm235, %v297, 0.0
    %v319 = vadd.f32 %v317, %v318
    %v320 = vsel %vm235, %v298, 0.0
    %v321 = vadd.f32 %v319, %v320
    %v322 = vsel %vm235, %v299, 0.0
    %v323 = vadd.f32 %v321, %v322
    %v324 = vsel %vm235, %v300, 0.0
    %v325 = vadd.f32 %v323, %v324
    %v326 = vsel %vm235, %v301, 0.0
    %v327 = vadd.f32 %v325, %v326
    %v328 = vsel %vm235, %v302, 0.0
    %v329 = vadd.f32 %v327, %v328
    %v330 = vsel %vm235, %v303, 0.0
    %v331 = vadd.f32 %v329, %v330
    %v332 = vsel %vm235, %v304, 0.0
    %v333 = vadd.f32 %v331, %v332
    %v334 = vsel %vm235, %v305, 0.0
    %v335 = vadd.f32 %v333, %v334
    %v336 = vsel %vm235, %v306, 0.0
    %v337 = vadd.f32 %v335, %v336
    %v338 = vrot.slane %v337, 4
    %v339 = vadd.f32 %v337, %v338
    %v340 = vrot.slane %v339, 2
    %v341 = vadd.f32 %v339, %v340
    %v342 = vrot.slane %v341, 1
    %v343 = vadd.f32 %v341, %v342
    %344 = vst.msk [vmem:[#allocation4] sm:$0x1] %vm289, %v343
    // Predicated region
    $region10: #{tpu_custom_call.1} parent=1 // pred_check
      _
    $region11: #{tpu_custom_call.1} parent=1 // pred_check_branch
      %346 = sbr.rel (0) target = $region13
    $region12: #{tpu_custom_call.1} parent=1 // pred_region
      _
    $region13: #{tpu_custom_call.1} parent=1 // pred_fallthru
      _
    // Predicated region
    $region14: #{tpu_custom_call.1} parent=1 // pred_check
      _
    $region15: #{tpu_custom_call.1} parent=1 // pred_check_branch
      %348 = sbr.rel (0) target = $region17
    $region16: #{tpu_custom_call.1} parent=1 // pred_region
      %s350 = ssub.s32 16, 16
      %351 = vsyncadd [#allocation3], %s350
      %s353 = sshll.u32 [#allocation2], 4
      %s354 = int_to_ptr.vmem [resolvable:$true] %s353
      %356 = dma.vmem_to_hbm [thread:$0]  %s354, 16, %s3, [#allocation3]
    $region17: #{tpu_custom_call.1} parent=1 // pred_fallthru
      _
    // Predicated region
    $region18: #{tpu_custom_call.1} parent=1 // pred_check
      _
    $region19: #{tpu_custom_call.1} parent=1 // pred_check_branch
      %358 = sbr.rel (0) target = $region21
    $region20: #{tpu_custom_call.1} parent=1 // pred_region
      %s360 = ssub.s32 16, 16
      %361 = vsyncadd [#allocation5], %s360
      %s363 = sshll.u32 [#allocation4], 4
      %s364 = int_to_ptr.vmem [resolvable:$true] %s363
      %366 = dma.vmem_to_hbm [thread:$0]  %s364, 16, %s4, [#allocation5]
    $region21: #{tpu_custom_call.1} parent=1 // pred_fallthru
      _
    // Predicated region
    $region22: #{tpu_custom_call.1} parent=1 // pred_check
      _
    $region23: #{tpu_custom_call.1} parent=1 // pred_check_branch
      %368 = sbr.rel (0) target = $region25
    $region24: #{tpu_custom_call.1} parent=1 // pred_region
      _
    $region25: #{tpu_custom_call.1} parent=1 // pred_fallthru
      _
    // Predicated region
    $region26: #{tpu_custom_call.1} parent=1 // pred_check
      _
    $region27: #{tpu_custom_call.1} parent=1 // pred_check_branch
      %370 = sbr.rel (0) target = $region29
    $region28: #{tpu_custom_call.1} parent=1 // pred_region
      %371 = dma.done [#allocation3], 16
    $region29: #{tpu_custom_call.1} parent=1 // pred_fallthru
      _
    // Predicated region
    $region30: #{tpu_custom_call.1} parent=1 // pred_check
      _
    $region31: #{tpu_custom_call.1} parent=1 // pred_check_branch
      %373 = sbr.rel (0) target = $region33
    $region32: #{tpu_custom_call.1} parent=1 // pred_region
      %374 = dma.done [#allocation5], 16
    $region33: #{tpu_custom_call.1} parent=1 // pred_fallthru
      _
    %375 = vsyncpa [#allocation3], 1
    %376 = vsyncpa [#allocation5], 1

</llo_original>
